<compile_context>
chip_gen: v7x
topology: tpu7x:2x2x1
jax: 0.10.0
libtpu: 0.0.40
codegen_flags: <defaults>
</compile_context>

<pallas_src>
import functools
import math

import jax
import jax.numpy as jnp
from jax.experimental import pallas as pl
from jax.experimental.pallas import tpu as pltpu


# ------------------------------ helpers --------------------------------------
_TM, _TN, _TK = 512, 512, 512          # preferred MXU tiles (multiples of 256)
_VMEM_LIMIT = 48 * 1024 * 1024          # <= 48 MiB: safe on v7x (64 MiB/TC), ample on v5e/v6e


def _round_up(x, m):
    return (x + m - 1) // m * m


def _pick_tile(dim, preferred, align=8):
    """Return (tile, padded_dim) with tile | padded_dim and no pathological tiles.

    * dim >= preferred: use the preferred tile and pad the dim up to a multiple of
      it (never fall back to an 8-row / 128-col sliver tile).
    * dim <  preferred: a single full-dim tile (lightly padded for sublane
      alignment); full-dim blocks are always layout-legal.
    """
    if dim >= preferred:
        return preferred, _round_up(dim, preferred)
    d = _round_up(dim, align)
    return d, d


# ----------------------------- tiled linear -----------------------------------
def _linear_kernel(x_ref, w_ref, b_ref, o_ref, acc_ref):
    # grid = (M tiles, N tiles, K tiles); K (reduction) is the last axis.
    @pl.when(pl.program_id(2) == 0)
    def _init():
        acc_ref[...] = jnp.zeros(acc_ref.shape, acc_ref.dtype)

    acc_ref[...] += jnp.dot(
        x_ref[...], w_ref[...], preferred_element_type=jnp.float32
    )

    @pl.when(pl.program_id(2) == pl.num_programs(2) - 1)
    def _epilogue():
        o_ref[...] = (acc_ref[...] + b_ref[...]).astype(o_ref.dtype)   # fused bias


def prep_linear(w_t, b):
    """One-time weight prep (hoisted out of the forward): bf16 cast + tile pad."""
    K, N = w_t.shape
    tk, Kp = _pick_tile(K, _TK)
    tn, Np = _pick_tile(N, _TN)
    wp = jnp.pad(w_t.astype(jnp.bfloat16), ((0, Kp - K), (0, Np - N)))
    bp = jnp.pad(b.astype(jnp.float32), (0, Np - N)).reshape(1, Np)
    return {"w": wp, "b": bp, "K": K, "N": N, "tk": tk, "tn": tn}


def linear(x2d, lw, *, out_dtype=jnp.bfloat16, tm=_TM):
    """y = x2d @ W + b as a tiled Pallas matmul (bf16 MXU operands, f32 accumulation)."""
    M, K = x2d.shape
    assert K == lw["K"], (K, lw["K"])
    tk, tn = lw["tk"], lw["tn"]
    Kp, Np = lw["w"].shape
    tm, Mp = _pick_tile(M, tm)

    xb = jnp.pad(x2d.astype(jnp.bfloat16), ((0, Mp - M), (0, Kp - K)))
    grid = (Mp // tm, Np // tn, Kp // tk)

    cost = pl.CostEstimate(
        flops=2 * M * K * lw["N"],
        transcendentals=0,
        bytes_accessed=int(2 * (M * K + K * lw["N"]) + 4 * (M * lw["N"] + lw["N"])),
    )

    out = pl.pallas_call(
        _linear_kernel,
        out_shape=jax.ShapeDtypeStruct((Mp, Np), out_dtype),
        grid_spec=pltpu.PrefetchScalarGridSpec(
            num_scalar_prefetch=0,
            grid=grid,
            in_specs=[
                pl.BlockSpec((tm, tk), lambda i, j, k: (i, k)),
                pl.BlockSpec((tk, tn), lambda i, j, k: (k, j)),
                pl.BlockSpec((1, tn), lambda i, j, k: (0, j)),
            ],
            out_specs=pl.BlockSpec((tm, tn), lambda i, j, k: (i, j)),
            scratch_shapes=[pltpu.VMEM((tm, tn), jnp.float32)],
        ),
        compiler_params=pltpu.CompilerParams(
            dimension_semantics=("parallel", "parallel", "arbitrary"),
            vmem_limit_bytes=_VMEM_LIMIT,
        ),
        cost_estimate=cost,
    )(xb, lw["w"], lw["b"])
    return out[:M, :lw["N"]]


# --------------------------- flash attention ----------------------------------
def _flash_attn_kernel(qi_ref, ki_ref, q_ref, k_ref, v_ref, o_ref,
                       q_sc, m_sc, l_sc, acc_sc, *, num_heads, scale):
    # Blocks: q/k/v/o are (tq, C) with C = num_heads * D (heads packed along lanes).
    # Grid: (batch, schedule); the schedule visits only lower-triangle (qi, ki)
    # tile pairs, kv-last within each q tile.
    s = pl.program_id(1)
    qi = qi_ref[s]
    ki = ki_ref[s]
    tq, C = q_ref.shape
    tkv = k_ref.shape[0]
    D = C // num_heads

    @pl.when(ki == 0)
    def _init():
        # Stage scaled, head-split q once per q tile; reset softmax stats / acc.
        for h in range(num_heads):
            q_sc[h] = (q_ref[:, h * D:(h + 1) * D].astype(jnp.float32) * scale
                       ).astype(q_sc.dtype)
        m_sc[...] = jnp.full(m_sc.shape, -jnp.inf, m_sc.dtype)
        l_sc[...] = jnp.zeros(l_sc.shape, l_sc.dtype)
        acc_sc[...] = jnp.zeros(acc_sc.shape, acc_sc.dtype)

    # Loop-invariant causal mask for the diagonal tile (tq == tkv and qi == ki,
    # so q_pos >= k_pos reduces to row_iota >= col_iota).
    row = jax.lax.broadcasted_iota(jnp.int32, (tq, tkv), 0)
    col = jax.lax.broadcasted_iota(jnp.int32, (tq, tkv), 1)
    diag_mask = row >= col

    def _update(h, masked):
        lo = h * D
        kh = k_ref[:, lo:lo + D]
        vh = v_ref[:, lo:lo + D]
        # QK^T without materializing a transpose: contract the D axes directly.
        sc = jax.lax.dot_general(q_sc[h], kh, (((1,), (1,)), ((), ())),
                                 preferred_element_type=jnp.float32)
        if masked:
            sc = jnp.where(diag_mask, sc, -jnp.inf)
        m_prev = m_sc[h]
        m_new = jnp.maximum(m_prev, jnp.max(sc, axis=-1, keepdims=True))
        alpha = jnp.exp(m_prev - m_new)
        p = jnp.exp(sc - m_new)
        l_sc[h] = alpha * l_sc[h] + jnp.sum(p, axis=-1, keepdims=True)
        acc_sc[h] = alpha * acc_sc[h] + jnp.dot(
            p.astype(vh.dtype), vh, preferred_element_type=jnp.float32)
        m_sc[h] = m_new

    @pl.when(ki < qi)      # fully-visible off-diagonal tile: no mask work at all
    def _off_diag():
        for h in range(num_heads):
            _update(h, masked=False)

    @pl.when(ki == qi)     # diagonal tile: only place the mask is applied; it is
    def _diag():           # also the last kv step of this q tile (causal).
        for h in range(num_heads):
            _update(h, masked=True)
        for h in range(num_heads):
            inv_l = pl.reciprocal(l_sc[h], approx=True)       # EUP slot, ~free
            o_ref[:, h * D:(h + 1) * D] = (acc_sc[h] * inv_l).astype(o_ref.dtype)


def causal_attention(q, k, v, num_heads, *, tile=128):
    """q, k, v: (B, T, C) with C = num_heads * head_dim -> causal attention (B, T, C).

    Heads are processed together inside the kernel so the output block is lane-dense
    (last dim C) and emitted directly in (B, T, C) layout; the kv grid axis is a
    scalar-prefetched lower-triangle schedule so fully-masked kv tiles never run.
    """
    B, T, C = q.shape
    D = C // num_heads
    tq = min(tile, _round_up(T, 8))
    Tp = _round_up(T, tq)
    if Tp != T:
        pad = ((0, 0), (0, Tp - T), (0, 0))
        # Padded key positions are handled by the diagonal mask; padded query rows
        # are finite garbage and sliced off below.
        q, k, v = jnp.pad(q, pad), jnp.pad(k, pad), jnp.pad(v, pad)
    n_tiles = Tp // tq

    # Lower-triangle (qi, ki) schedule, kv-last within each q tile.
    qi_list, ki_list = [], []
    for i in range(n_tiles):
        for j in range(i + 1):
            qi_list.append(i)
            ki_list.append(j)
    qi_sched = jnp.asarray(qi_list, jnp.int32)
    ki_sched = jnp.asarray(ki_list, jnp.int32)
    n_sched = len(qi_list)

    q_spec = pl.BlockSpec((None, tq, C), lambda b, s, qi, ki: (b, qi[s], 0))
    kv_spec = pl.BlockSpec((None, tq, C), lambda b, s, qi, ki: (b, ki[s], 0))
    o_spec = pl.BlockSpec((None, tq, C), lambda b, s, qi, ki: (b, qi[s], 0))

    cost = pl.CostEstimate(
        flops=2 * B * num_heads * T * T * D,            # ~causal half of 4*B*H*T^2*D
        transcendentals=B * num_heads * T * T // 2,
        bytes_accessed=int(4 * B * T * C * q.dtype.itemsize),
    )

    kernel = functools.partial(
        _flash_attn_kernel, num_heads=num_heads, scale=1.0 / math.sqrt(D))

    out = pl.pallas_call(
        kernel,
        out_shape=jax.ShapeDtypeStruct((B, Tp, C), q.dtype),
        grid_spec=pltpu.PrefetchScalarGridSpec(
            num_scalar_prefetch=2,
            grid=(B, n_sched),
            in_specs=[q_spec, kv_spec, kv_spec],
            out_specs=o_spec,
            scratch_shapes=[
                pltpu.VMEM((num_heads, tq, D), q.dtype),      # scaled, head-split q
                pltpu.VMEM((num_heads, tq, 1), jnp.float32),  # running max
                pltpu.VMEM((num_heads, tq, 1), jnp.float32),  # running sum
                pltpu.VMEM((num_heads, tq, D), jnp.float32),  # output accumulator
            ],
        ),
        compiler_params=pltpu.CompilerParams(
            dimension_semantics=("parallel", "arbitrary"),
            vmem_limit_bytes=_VMEM_LIMIT,
        ),
        cost_estimate=cost,
    )(qi_sched, ki_sched, q, k, v)
    return out[:, :T, :]


# ------------------------------ full module ----------------------------------
def init_params(key, hidden_size, num_heads):
    """Raw f32 parameters with PyTorch nn.Linear semantics (weights stored transposed)."""
    ks = jax.random.split(key, 6)
    lim = 1.0 / math.sqrt(hidden_size)

    def u(k, shape):
        return jax.random.uniform(k, shape, jnp.float32, -lim, lim)

    return {
        "num_heads": num_heads,
        # input_proj: Linear(C, C)
        "w_in_t": u(ks[0], (hidden_size, hidden_size)),
        "b_in": u(ks[1], (hidden_size,)),
        # query_key_value: Linear(C, 3C)
        "w_qkv_t": u(ks[2], (hidden_size, 3 * hidden_size)),
        "b_qkv": u(ks[3], (3 * hidden_size,)),
        # o_proj: Linear(C, C)
        "w_o_t": u(ks[4], (hidden_size, hidden_size)),
        "b_o": u(ks[5], (hidden_size,)),
    }


def prepare_params(raw):
    """One-time weight prep (bf16 cast + tile pad + qkv column split), hoisted out
    of the forward pass.  chunk(3, dim=-1) on the qkv output is exactly a column
    split of the qkv weight / bias, so semantics are unchanged."""
    C = raw["w_in_t"].shape[0]
    w_qkv, b_qkv = raw["w_qkv_t"], raw["b_qkv"]
    return {
        "num_heads": raw["num_heads"],
        "in": prep_linear(raw["w_in_t"], raw["b_in"]),
        "q": prep_linear(w_qkv[:, 0 * C:1 * C], b_qkv[0 * C:1 * C]),
        "k": prep_linear(w_qkv[:, 1 * C:2 * C], b_qkv[1 * C:2 * C]),
        "v": prep_linear(w_qkv[:, 2 * C:3 * C], b_qkv[2 * C:3 * C]),
        "o": prep_linear(raw["w_o_t"], raw["b_o"]),
    }


def causal_self_attention(x, prepped):
    """Forward pass of CausalSelfAttention (eval mode, dropout_p = 0)."""
    B, T, C = x.shape
    nH = prepped["num_heads"]

    x2 = x.reshape(B * T, C)
    h = linear(x2, prepped["in"])                       # input_proj        (B*T, C) bf16
    q = linear(h, prepped["q"]).reshape(B, T, C)        # query projection  (B, T, C)
    k = linear(h, prepped["k"]).reshape(B, T, C)        # key projection
    v = linear(h, prepped["v"]).reshape(B, T, C)        # value projection

    # scaled_dot_product_attention(..., is_causal=True), dropout_p = 0 (eval mode).
    # Heads stay packed along the channel dim; no XLA head transposes around the kernel.
    ctx = causal_attention(q, k, v, nH)                 # (B, T, C)

    out = linear(ctx.reshape(B * T, C), prepped["o"], out_dtype=jnp.float32)  # o_proj
    return out.reshape(B, T, C)


# ------------------------------ reference ------------------------------------
def _reference(x, raw):
    """Pure-JAX f32 reference of the same forward pass (sanity check)."""
    B, T, C = x.shape
    nH = raw["num_heads"]
    D = C // nH
    h = x @ raw["w_in_t"] + raw["b_in"]
    qkv = h @ raw["w_qkv_t"] + raw["b_qkv"]
    q, k, v = jnp.split(qkv, 3, axis=-1)

    def heads(t):
        return t.reshape(B, T, nH, D).transpose(0, 2, 1, 3)

    q, k, v = heads(q), heads(k), heads(v)
    s = (q @ jnp.swapaxes(k, -1, -2)) / math.sqrt(D)
    mask = jnp.tril(jnp.ones((T, T), bool))
    s = jnp.where(mask, s, -jnp.inf)
    p = jax.nn.softmax(s, axis=-1)
    ctx = (p @ v).transpose(0, 2, 1, 3).reshape(B, T, C)
    return ctx @ raw["w_o_t"] + raw["b_o"]


if __name__ == "__main__":
    # Small config consistent with the module: hidden=32, heads=4 (head_dim=8),
    # batch=2, seq=8.
    B, T, C, NH = 2, 8, 32, 4
    key = jax.random.PRNGKey(0)
    k_x, k_p = jax.random.split(key)
    x = jax.random.normal(k_x, (B, T, C), jnp.float32)

    raw = init_params(k_p, C, NH)
    prepped = prepare_params(raw)   # one-time weight prep (hoisted out of forward)

    out = causal_self_attention(x, prepped)
    jax.block_until_ready(out)
    assert out.shape == (B, T, C)
    assert bool(jnp.all(jnp.isfinite(out)))

    ref = _reference(x, raw)
    err = float(jnp.max(jnp.abs(out - ref)))
    # Loose tolerance: kernels use bf16 MXU operands + approx EUP reciprocal.
    assert err < 0.1, f"max abs error vs reference too large: {err}"

    print("KERNEL_OK")
</pallas_src>

<mosaic_0001>
module attributes {stable_mosaic.version = 11 : i64} {
  func.func @_linear_kernel(%arg0: i32, %arg1: i32, %arg2: i32, %arg3: memref<16x32xbf16, #tpu.memory_space<vmem>>, %arg4: memref<32x32xbf16, #tpu.memory_space<vmem>>, %arg5: memref<1x32xf32, #tpu.memory_space<vmem>>, %arg6: memref<16x32xbf16, #tpu.memory_space<vmem>>, %arg7: memref<16x32xf32, #tpu.memory_space<vmem>>) attributes {dimension_semantics = [#tpu.dimension_semantics<parallel>, #tpu.dimension_semantics<parallel>, #tpu.dimension_semantics<arbitrary>], iteration_bounds = array<i64: 1, 1, 1>, scalar_prefetch = 0 : i64, scratch_operands = 1 : i64, tpu.core_type = #tpu.core_type<tc>, window_params = [{transform_indices = @transform_0, window_bounds = array<i64: 16, 32>}, {transform_indices = @transform_1, window_bounds = array<i64: 32, 32>}, {transform_indices = @transform_2, window_bounds = array<i64: 1, 32>}, {transform_indices = @transform_3, window_bounds = array<i64: 16, 32>}]} {
    %c0_i32 = arith.constant 0 : i32
    %0 = arith.cmpi eq, %arg2, %c0_i32 : i32
    %1 = arith.extui %0 : i1 to i32
    %c0_i32_0 = arith.constant 0 : i32
    %2 = arith.cmpi ne, %1, %c0_i32_0 : i32
    scf.if %2 {
      %cst_10 = arith.constant 0.000000e+00 : f32
      %12 = vector.broadcast %cst_10 : f32 to vector<16x32xf32>
      %c0_11 = arith.constant 0 : index
      %c0_12 = arith.constant 0 : index
      %13 = vector.load %arg7[%c0_11, %c0_12] : memref<16x32xf32, #tpu.memory_space<vmem>>, vector<16x32xf32>
      tpu.vector_store %arg7[%c0_11, %c0_12], %12 {strides = array<i32>} : memref<16x32xf32, #tpu.memory_space<vmem>>, vector<16x32xf32>,
    } else {
    }
    %c0 = arith.constant 0 : index
    %c0_1 = arith.constant 0 : index
    %3 = vector.load %arg7[%c0, %c0_1] : memref<16x32xf32, #tpu.memory_space<vmem>>, vector<16x32xf32>
    %c0_2 = arith.constant 0 : index
    %c0_3 = arith.constant 0 : index
    %4 = vector.load %arg3[%c0_2, %c0_3] : memref<16x32xbf16, #tpu.memory_space<vmem>>, vector<16x32xbf16>
    %c0_4 = arith.constant 0 : index
    %c0_5 = arith.constant 0 : index
    %5 = vector.load %arg4[%c0_4, %c0_5] : memref<32x32xbf16, #tpu.memory_space<vmem>>, vector<32x32xbf16>
    %cst = arith.constant dense<0.000000e+00> : vector<16x32xf32>
    %6 = tpu.matmul %4, %5, %cst {dimension_numbers = #tpu.dot_dimension_numbers<[1], [0], [0], [1], [0, 0, 1, 1], [], []>} : vector<16x32xbf16>, vector<32x32xbf16>, vector<16x32xf32> -> vector<16x32xf32>
    %7 = arith.addf %3, %6 : vector<16x32xf32>
    %c0_6 = arith.constant 0 : index
    %c0_7 = arith.constant 0 : index
    %8 = vector.load %arg7[%c0_6, %c0_7] : memref<16x32xf32, #tpu.memory_space<vmem>>, vector<16x32xf32>
    tpu.vector_store %arg7[%c0_6, %c0_7], %7 {strides = array<i32>} : memref<16x32xf32, #tpu.memory_space<vmem>>, vector<16x32xf32>,
    %c0_i32_8 = arith.constant 0 : i32
    %9 = arith.cmpi eq, %arg2, %c0_i32_8 : i32
    %10 = arith.extui %9 : i1 to i32
    %c0_i32_9 = arith.constant 0 : i32
    %11 = arith.cmpi ne, %10, %c0_i32_9 : i32
    scf.if %11 {
      %c0_10 = arith.constant 0 : index
      %c0_11 = arith.constant 0 : index
      %12 = vector.load %arg7[%c0_10, %c0_11] : memref<16x32xf32, #tpu.memory_space<vmem>>, vector<16x32xf32>
      %c0_12 = arith.constant 0 : index
      %c0_13 = arith.constant 0 : index
      %13 = vector.load %arg5[%c0_12, %c0_13] : memref<1x32xf32, #tpu.memory_space<vmem>>, vector<1x32xf32>
      %14 = vector.broadcast %13 : vector<1x32xf32> to vector<16x32xf32>
      %15 = arith.addf %12, %14 : vector<16x32xf32>
      %16 = arith.truncf %15 : vector<16x32xf32> to vector<16x32xbf16>
      %c0_14 = arith.constant 0 : index
      %c0_15 = arith.constant 0 : index
      %17 = vector.load %arg6[%c0_14, %c0_15] : memref<16x32xbf16, #tpu.memory_space<vmem>>, vector<16x32xbf16>
      tpu.vector_store %arg6[%c0_14, %c0_15], %16 {strides = array<i32>} : memref<16x32xbf16, #tpu.memory_space<vmem>>, vector<16x32xbf16>,
    } else {
    }
    return
  }
  func.func @transform_0(%arg0: i32, %arg1: i32, %arg2: i32) -> (i32, i32) {
    %c0_i32 = arith.constant 0 : i32
    return %arg0, %arg2 : i32, i32
  }
  func.func @transform_1(%arg0: i32, %arg1: i32, %arg2: i32) -> (i32, i32) {
    %c0_i32 = arith.constant 0 : i32
    return %arg2, %arg1 : i32, i32
  }
  func.func @transform_2(%arg0: i32, %arg1: i32, %arg2: i32) -> (i32, i32) {
    %c0_i32 = arith.constant 0 : i32
    %c0_i32_0 = arith.constant 0 : i32
    return %c0_i32, %arg1 : i32, i32
  }
  func.func @transform_3(%arg0: i32, %arg1: i32, %arg2: i32) -> (i32, i32) {
    %c0_i32 = arith.constant 0 : i32
    return %arg0, %arg1 : i32, i32
  }
}

</mosaic_0001>

<llo_original>
// kernel: tpu_custom_call.1
$region0: #{tpu_custom_call.1}
  #allocation0 [shape = 'u32[]', space=smem, size = 0x4, offset = 0x4, fixed_abs, tag = 'smem constant byte address 0x4 - core index']
  #allocation1 [shape = 'u32[144,128]{1,0:T(1,128)}', space=vmem, size = 0x12000, scoped, tag = 'internal scratch']
  #allocation2 [shape = 'f32[16,32]{1,0:T(8,128)}', space=vmem, size = 0x2000, scoped, tag = 'scratch operand']
  %s0 = inlined_call_operand.hbm [shape: bf16[16,32], index: 0, kind: input, shape index: {}]
  %s1 = inlined_call_operand.hbm [shape: bf16[32,32], index: 1, kind: input, shape index: {}]
  %s2 = inlined_call_operand.vmem [shape: f32[1,32], index: 2, kind: input, shape index: {}]
  %s3 = inlined_call_operand.hbm [shape: bf16[16,32], index: 3, kind: output, shape index: {}]
  %s4 = sld [smem:[#allocation0]]
  $region38: #{tpu_custom_call.1} parent=0
    _
  %s6 = ssub.s32 1, %s4
  %s7 = scalar_select 0, %s6, %s4
  $region1: #{tpu_custom_call.1} parent=0
    #allocation3 [shape = 'u8[4096]{0}', space=vmem, size = 0x1000, scoped, tag = 'input window, operand 0, single buffered']
    #allocation4 [shape = 's32[1]{0}', space=sflag, size = 0x4, scoped, tag = 'scoped memory for tpu_custom_call.1']
    #allocation5 [shape = 's32[1]{0}', space=sflag, size = 0x4, scoped, tag = 'scoped memory for tpu_custom_call.1']
    #allocation6 [shape = 'u8[8192]{0}', space=vmem, size = 0x2000, scoped, tag = 'input window, operand 1, single buffered']
    #allocation7 [shape = 's32[1]{0}', space=sflag, size = 0x4, scoped, tag = 'scoped memory for tpu_custom_call.1']
    #allocation8 [shape = 'u8[4096]{0}', space=vmem, size = 0x1000, scoped, tag = 'output window, operand 0, single buffered']
    %8 = vsyncpa [#allocation4], 0
    %9 = vsyncpa [#allocation7], 0
    %10 = vsyncpa [#allocation5], 0
    // Predicated region
    $region2: #{tpu_custom_call.1} parent=1 // pred_check
      _
    $region3: #{tpu_custom_call.1} parent=1 // pred_check_branch
      %12 = sbr.rel (0) target = $region5
    $region4: #{tpu_custom_call.1} parent=1 // pred_region
      %s14 = ssub.s32 128, 128
      %15 = vsyncadd [#allocation4], %s14
      %s16 = sshll.u32 [#allocation3], 4
      %s17 = int_to_ptr.vmem [resolvable:$true] %s16
      %22 = dma.hbm_to_vmem [thread:$0]  %s0, 128, %s17, [#allocation4], 64, 64, 4
    $region5: #{tpu_custom_call.1} parent=1 // pred_fallthru
      _
    // Predicated region
    $region6: #{tpu_custom_call.1} parent=1 // pred_check
      _
    $region7: #{tpu_custom_call.1} parent=1 // pred_check_branch
      %24 = sbr.rel (0) target = $region9
    $region8: #{tpu_custom_call.1} parent=1 // pred_region
      %s26 = ssub.s32 256, 256
      %27 = vsyncadd [#allocation7], %s26
      %s28 = sshll.u32 [#allocation6], 4
      %s29 = int_to_ptr.vmem [resolvable:$true] %s28
      %34 = dma.hbm_to_vmem [thread:$0]  %s1, 256, %s29, [#allocation7], 64, 64, 4
    $region9: #{tpu_custom_call.1} parent=1 // pred_fallthru
      _
    // Predicated region
    $region10: #{tpu_custom_call.1} parent=1 // pred_check
      _
    $region11: #{tpu_custom_call.1} parent=1 // pred_check_branch
      %36 = sbr.rel (0) target = $region13
    $region12: #{tpu_custom_call.1} parent=1 // pred_region
      _
    $region13: #{tpu_custom_call.1} parent=1 // pred_fallthru
      _
    // Predicated region
    $region14: #{tpu_custom_call.1} parent=1 // pred_check
      _
    $region15: #{tpu_custom_call.1} parent=1 // pred_check_branch
      %38 = sbr.rel (0) target = $region17
    $region16: #{tpu_custom_call.1} parent=1 // pred_region
      %39 = dma.done [#allocation4], 128
    $region17: #{tpu_custom_call.1} parent=1 // pred_fallthru
      _
    // Predicated region
    $region18: #{tpu_custom_call.1} parent=1 // pred_check
      _
    $region19: #{tpu_custom_call.1} parent=1 // pred_check_branch
      %41 = sbr.rel (0) target = $region21
    $region20: #{tpu_custom_call.1} parent=1 // pred_region
      %42 = dma.done [#allocation7], 256
    $region21: #{tpu_custom_call.1} parent=1 // pred_fallthru
      _
    %p44 = scmp.eq.s32.totalorder 0, 0
    // Predicated region
    $region22: #{tpu_custom_call.1} parent=1 // pred_check
      %p45 = pneg %p44
    $region23: #{tpu_custom_call.1} parent=1 // pred_check_branch
      %47 = sbr.rel (%p45) target = $region25
    $region24: #{tpu_custom_call.1} parent=1 // pred_region
      %vm48 = vcmask 261120
      %49 = vst.msk [vmem:[#allocation2] sm:$0xff] %vm48, 0.0
      %50 = vst.msk [vmem:[#allocation2 + $0x8] sm:$0xff] %vm48, 0.0
    $region25: #{tpu_custom_call.1} parent=1 // pred_fallthru
      _
    %v51 = vld [vmem:[#allocation2] sm:$0xff]
    %v52 = vld [vmem:[#allocation2 + $0x8] sm:$0xff]
    %v53 = vld [vmem:[#allocation3] sm:$0xf]
    %v54 = vld [vmem:[#allocation3 + $0x4] sm:$0xf]
    %v55 = vld [vmem:[#allocation6] sm:$0xf]
    %v56 = vld [vmem:[#allocation6 + $0x4] sm:$0xf]
    %v57 = vld [vmem:[#allocation6 + $0x8] sm:$0xf]
    %v58 = vld [vmem:[#allocation6 + $0xc] sm:$0xf]
    %v61 = vunpack.c.l.b16 %v53
    %v62 = vunpack.c.l.b16 %v54
    %v63 = vpack.c.b16 %v62, %v61
    %v68 = vunpack.c.l.b16 %v55
    %v69 = vunpack.c.l.b16 %v56
    %v70 = vunpack.c.l.b16 %v57
    %v71 = vunpack.c.l.b16 %v58
    %v72 = vpack.c.b16 %v69, %v68
    %v73 = vpack.c.b16 %v71, %v70
    %vm76 = vcmask 261120
    %v78 = vsel %vm76, %v63, 0
    %80 = vmatprep.subr.bf16.mxu0 0
    %81 = vmatpush1.bf16.msra.mxu0 %v72
    %82 = vmatprep.subr.bf16.mxu0 0
    %83 = vmatpush1.bf16.msra.mxu0 %v73
    %84 = vmatprep.subr.bf16.mxu0 0
    %85 = vmatpush1.bf16.msra.mxu0 0
    %86 = vmatprep.subr.bf16.mxu0 0
    %87 = vmatpush1.bf16.msra.mxu0 0
    %88 = vmatprep.subr.bf16.mxu0 0
    %89 = vmatpush1.bf16.msra.mxu0 0
    %90 = vmatprep.subr.bf16.mxu0 0
    %91 = vmatpush1.bf16.msra.mxu0 0
    %92 = vmatprep.subr.bf16.mxu0 0
    %93 = vmatpush1.bf16.msra.mxu0 0
    %94 = vmatprep.subr.bf16.mxu0 0
    %95 = vmatpush1.bf16.msra.mxu0 0
    %96 = vmatprep.subr.bf16.mxu0 0
    %97 = vmatpush1.bf16.msra.mxu0 0
    %98 = vmatprep.subr.bf16.mxu0 0
    %99 = vmatpush1.bf16.msra.mxu0 0
    %100 = vmatprep.subr.bf16.mxu0 0
    %101 = vmatpush1.bf16.msra.mxu0 0
    %102 = vmatprep.subr.bf16.mxu0 0
    %103 = vmatpush1.bf16.msra.mxu0 0
    %104 = vmatprep.subr.bf16.mxu0 0
    %105 = vmatpush1.bf16.msra.mxu0 0
    %106 = vmatprep.subr.bf16.mxu0 0
    %107 = vmatpush1.bf16.msra.mxu0 0
    %108 = vmatprep.subr.bf16.mxu0 0
    %109 = vmatpush1.bf16.msra.mxu0 0
    %110 = vmatprep.subr.bf16.mxu0 0
    %111 = vmatpush1.bf16.msra.mxu0 0
    %112 = vmatprep.mubr.bf16.mxu0 0
    %113 = vmatmul.mubr.bf16.gmra.mrb[0].mxu0 %v78
    %v114 = vpop.f32.mrb[0].mxu0
    %v115 = vadd.f32 0.0, %v114
    %v116 = vpop.f32.mrb[0].mxu0
    %v117 = vpop.f32.mrb[0].mxu0
    %v118 = vadd.f32 0.0, %v117
    %v119 = vpop.f32.mrb[0].mxu0
    %120 = vdwg.mxu0
    %v121 = vadd.f32 %v51, %v115
    %v122 = vadd.f32 %v52, %v118
    %123 = vst.msk [vmem:[#allocation2] sm:$0xff] %vm76, %v121
    %124 = vst.msk [vmem:[#allocation2 + $0x8] sm:$0xff] %vm76, %v122
    // Predicated region
    $region26: #{tpu_custom_call.1} parent=1 // pred_check
      %p125 = pneg %p44
    $region27: #{tpu_custom_call.1} parent=1 // pred_check_branch
      %127 = sbr.rel (%p125) target = $region29
    $region28: #{tpu_custom_call.1} parent=1 // pred_region
      %v128 = vld [vmem:[#allocation2] sm:$0xff]
      %v129 = vld [vmem:[#allocation2 + $0x8] sm:$0xff]
      %v130 = vld [vmem:[%s2] sm:$0x1]
      %v132 = vlaneseq
      %v133 = vshrl.u32 %v132, 7
      %v134 = vsub.s32 0, %v133
      %v135 = vrot.slane %v130, %v134
      %v137 = vadd.f32 %v128, %v135
      %v138 = vadd.f32 %v129, %v135
      %v139 = vpack.c.bf16 %v138, %v137
      %v141 = vunpack.c.l.b16 %v139
      %v142 = vunpack.c.h.b16 %v139
      %v143 = vpack.c.b16 %v141, %v141
      %v144 = vpack.c.b16 %v142, %v142
      %vm147 = vcmask 257024
      %148 = vst.msk [vmem:[#allocation8] sm:$0xf] %vm147, %v143
      %149 = vst.msk [vmem:[#allocation8 + $0x4] sm:$0xf] %vm147, %v144
    $region29: #{tpu_custom_call.1} parent=1 // pred_fallthru
      _
    // Predicated region
    $region30: #{tpu_custom_call.1} parent=1 // pred_check
      _
    $region31: #{tpu_custom_call.1} parent=1 // pred_check_branch
      %151 = sbr.rel (0) target = $region33
    $region32: #{tpu_custom_call.1} parent=1 // pred_region
      %s153 = ssub.s32 128, 128
      %154 = vsyncadd [#allocation5], %s153
      %s155 = sshll.u32 [#allocation8], 4
      %s156 = int_to_ptr.vmem [resolvable:$true] %s155
      %161 = dma.vmem_to_hbm [thread:$0]  %s156, 128, %s3, [#allocation5], 64, 64, 4
    $region33: #{tpu_custom_call.1} parent=1 // pred_fallthru
      _
    // Predicated region
    $region34: #{tpu_custom_call.1} parent=1 // pred_check
      _
    $region35: #{tpu_custom_call.1} parent=1 // pred_check_branch
      %163 = sbr.rel (0) target = $region37
    $region36: #{tpu_custom_call.1} parent=1 // pred_region
      %164 = dma.done [#allocation5], 128
    $region37: #{tpu_custom_call.1} parent=1 // pred_fallthru
      _
    %165 = vsyncpa [#allocation4], 1
    %166 = vsyncpa [#allocation7], 1
    %167 = vsyncpa [#allocation5], 1

</llo_original>
